<compile_context>
chip_gen: v6e
topology: v6e:2x2x1
jax: 0.10.0
libtpu: 0.0.40
codegen_flags: <defaults>
</compile_context>

<pallas_src>
import functools

import jax
import jax.numpy as jnp
from jax.experimental import pallas as pl
from jax.experimental.pallas import tpu as pltpu


def _ce_kernel(preds_ref, tgt_ref, loss_ref, *, ignore_index):
    x = preds_ref[...]                                    # (TN, C) native dtype
    t = tgt_ref[...]                                      # (TN, 1) int32

    # Row max on the native-dtype block (XLU reduce); only the (TN,1) result is
    # cast, so there is no separate full-block cast pass before the subtract.
    m = jnp.max(x, axis=-1, keepdims=True)                # (TN, 1) native
    # Shifted logits are the single big f32 temporary; they feed both the
    # exp-sum and the target-logit gather.  loss = log(sum(exp(xm))) - xm_t is
    # algebraically identical to lse - x_t.
    xm = x.astype(jnp.float32) - m.astype(jnp.float32)    # (TN, C) f32

    s = jnp.sum(jnp.exp(xm), axis=-1, keepdims=True)      # (TN, 1)

    # Target-logit gather via masked select (no dynamic cross-lane gather on
    # TPU).  (1, C) iota keeps the index block tiny; jnp.where avoids the
    # inf*0 -> nan a one-hot multiply could produce.
    col = jax.lax.broadcasted_iota(jnp.int32, (1, x.shape[1]), 1)
    picked = jnp.sum(jnp.where(col == t, xm, 0.0), axis=-1, keepdims=True)

    loss = jnp.log(s) - picked                            # per-sample NLL, (TN, 1)
    loss_ref[...] = jnp.where(t != ignore_index, loss, 0.0)
    # TODO(synk): a lane-dense (1, TN) output slab (sublane->lane relayout of the
    # per-row tail) would remove the masked vst.msk stores; skipped here to avoid
    # relying on in-kernel (TN,1)<->(1,TN) relayout lowering.


def _vmem_budget():
    """(tile_budget_bytes, vmem_limit_bytes), tuned per TPU generation."""
    try:
        cap = pltpu.get_tpu_info().vmem_capacity_bytes    # 128 MiB v5e/v6e, 64 MiB/TC v7x
    except Exception:
        cap = 64 * 1024 * 1024                            # assume the tightest case
    vmem_limit = min(cap * 3 // 4, 96 * 1024 * 1024)
    tile_budget = vmem_limit * 3 // 5                     # leave headroom for compiler scratch
    return tile_budget, vmem_limit


def _choose_row_tile(n, c, itemsize, tile_budget):
    """Row tile: double-buffered native-dtype preds block + in-kernel f32
    temporaries + lane-padded (TN,1) target/output blocks fit `tile_budget`,
    and the grid keeps >= 4 steps so the parallel N axis shards across both
    TensorCores on v7x."""
    c_pad = -(-c // 128) * 128                            # lane-padded class count
    # per-row bytes: 2 preds buffers (native dtype) + ~5 live (TN, C_pad) f32/bool
    # temporaries (cast, xm, exp, mask, masked-select) + 2x(TN,1) int32 target
    # buffers + 2x(TN,1) f32 output buffers (each (TN,1) block pads to 128 lanes).
    per_row = c_pad * (2 * itemsize + 5 * 4) + 4 * 512
    tn = tile_budget // per_row
    tn = min(tn, -(-n // 4))                              # >= 4 grid steps when n allows
    tn = (tn // 8) * 8                                    # sublane-aligned
    if tn < 8 or tn >= n:
        return n                                          # single full block
    return tn


def cross_entropy_loss(preds, targets, *, reduction="mean", loss_weight=1.0,
                       ignore_index=None, avg_non_ignore=False, avg_factor=None):
    """Matches CrossEntropyLoss.forward with weight=None, class_weight=None."""
    # TODO(synk): per-sample `weight` and per-class `class_weight` rescaling are
    # not plumbed into the kernel (module defaults leave them as None).
    # TODO(synk): vocab-scale C (32k+) needs a second grid axis over C with an
    # online/streaming LSE; current kernel assumes one (TN, C) block fits VMEM.
    ignore_index = -100 if ignore_index is None else ignore_index
    N, C = preds.shape

    itemsize = jnp.dtype(preds.dtype).itemsize
    tile_budget, vmem_limit = _vmem_budget()
    TN = _choose_row_tile(N, C, itemsize, tile_budget)
    grid = (pl.cdiv(N, TN),)                              # partial last block is masked

    targets2d = targets.reshape(N, 1).astype(jnp.int32)

    kernel = functools.partial(_ce_kernel, ignore_index=ignore_index)
    per_sample = pl.pallas_call(
        kernel,
        out_shape=jax.ShapeDtypeStruct((N, 1), jnp.float32),
        grid_spec=pltpu.PrefetchScalarGridSpec(
            num_scalar_prefetch=0,
            grid=grid,
            in_specs=[
                pl.BlockSpec((TN, C), lambda i: (i, 0)),
                pl.BlockSpec((TN, 1), lambda i: (i, 0)),
            ],
            out_specs=pl.BlockSpec((TN, 1), lambda i: (i, 0)),
        ),
        compiler_params=pltpu.CompilerParams(
            dimension_semantics=("parallel",),            # no cross-step state -> megacore OK
            vmem_limit_bytes=vmem_limit),
    )(preds, targets2d)                                   # native dtype; cast happens in-kernel

    per_sample = per_sample[:, 0]

    if reduction == "none":
        out = per_sample
    elif reduction == "sum":
        out = jnp.sum(per_sample)
    elif reduction == "mean":
        if avg_factor is None and avg_non_ignore:
            avg_factor = jnp.sum(targets != ignore_index).astype(jnp.float32)
        # avg_non_ignore=False (module default): divide by N including ignored
        # samples, matching the mmdet-style weight_reduce_loss contract.
        denom = jnp.float32(N) if avg_factor is None else jnp.asarray(
            avg_factor, jnp.float32)
        out = jnp.sum(per_sample) / denom
    else:
        raise ValueError(f"unknown reduction {reduction!r}")

    return loss_weight * out


def _reference(preds, targets, ignore_index=-100):
    logp = jax.nn.log_softmax(preds.astype(jnp.float32), axis=-1)
    nll = -jnp.take_along_axis(
        logp, jnp.clip(targets, 0, preds.shape[1] - 1)[:, None], axis=-1)[:, 0]
    nll = jnp.where(targets == ignore_index, 0.0, nll)
    return jnp.mean(nll)   # reduction='mean', avg_non_ignore=False


if __name__ == "__main__":
    key = jax.random.PRNGKey(0)

    # Case 1: tiny shapes (single-block path), f32 logits, one ignored sample.
    k1, k2 = jax.random.split(key)
    n1, c1 = 16, 10
    preds1 = jax.random.normal(k1, (n1, c1), dtype=jnp.float32)
    tgts1 = jax.random.randint(k2, (n1,), 0, c1, dtype=jnp.int32).at[3].set(-100)
    loss1 = jax.block_until_ready(
        cross_entropy_loss(preds1, tgts1, reduction="mean", loss_weight=1.0,
                           ignore_index=None, avg_non_ignore=False))
    ref1 = _reference(preds1, tgts1)
    assert jnp.allclose(loss1, ref1, atol=1e-5, rtol=1e-5), (loss1, ref1)

    # Case 2: tiled path with a partial last row block, bf16 logits.
    k3, k4 = jax.random.split(k1)
    n2, c2 = 520, 384
    preds2 = jax.random.normal(k3, (n2, c2), dtype=jnp.bfloat16)
    tgts2 = jax.random.randint(k4, (n2,), 0, c2, dtype=jnp.int32)
    tgts2 = tgts2.at[7].set(-100).at[300].set(-100)
    loss2 = jax.block_until_ready(
        cross_entropy_loss(preds2, tgts2, reduction="mean", loss_weight=1.0,
                           ignore_index=None, avg_non_ignore=False))
    ref2 = _reference(preds2, tgts2)
    assert jnp.allclose(loss2, ref2, atol=1e-4, rtol=1e-4), (loss2, ref2)

    print("KERNEL_OK")
</pallas_src>

<mosaic_0001>
module attributes {stable_mosaic.version = 11 : i64} {
  func.func @_ce_kernel(%arg0: i32, %arg1: memref<16x10xf32, #tpu.memory_space<vmem>>, %arg2: memref<16x1xi32, #tpu.memory_space<vmem>>, %arg3: memref<16x1xf32, #tpu.memory_space<vmem>>) attributes {dimension_semantics = [#tpu.dimension_semantics<parallel>], iteration_bounds = array<i64: 1>, scalar_prefetch = 0 : i64, scratch_operands = 0 : i64, tpu.core_type = #tpu.core_type<tc>, window_params = [{transform_indices = @transform_0, window_bounds = array<i64: 16, 10>}, {transform_indices = @transform_1, window_bounds = array<i64: 16, 1>}, {transform_indices = @transform_2, window_bounds = array<i64: 16, 1>}]} {
    %c0 = arith.constant 0 : index
    %c0_0 = arith.constant 0 : index
    %0 = vector.load %arg1[%c0, %c0_0] : memref<16x10xf32, #tpu.memory_space<vmem>>, vector<16x10xf32>
    %c0_1 = arith.constant 0 : index
    %c0_2 = arith.constant 0 : index
    %1 = vector.load %arg2[%c0_1, %c0_2] : memref<16x1xi32, #tpu.memory_space<vmem>>, vector<16x1xi32>
    %cst = arith.constant dense<0xFF800000> : vector<16xf32>
    %2 = vector.multi_reduction <maximumf>, %0, %cst [1] : vector<16x10xf32> to vector<16xf32>
    %3 = vector.shape_cast %2 : vector<16xf32> to vector<16x1xf32>
    %4 = vector.broadcast %3 : vector<16x1xf32> to vector<16x10xf32>
    %5 = arith.subf %0, %4 : vector<16x10xf32>
    %6 = math.exp %5 : vector<16x10xf32>
    %cst_3 = arith.constant dense<0.000000e+00> : vector<16xf32>
    %7 = vector.multi_reduction <add>, %6, %cst_3 [1] : vector<16x10xf32> to vector<16xf32>
    %8 = vector.shape_cast %7 : vector<16xf32> to vector<16x1xf32>
    %9 = tpu.iota {dimensions = array<i32: 1>} : vector<1x10xi32>
    %10 = vector.broadcast %9 : vector<1x10xi32> to vector<16x10xi32>
    %11 = vector.broadcast %1 : vector<16x1xi32> to vector<16x10xi32>
    %12 = arith.cmpi eq, %10, %11 : vector<16x10xi32>
    %cst_4 = arith.constant 0.000000e+00 : f32
    %13 = vector.broadcast %cst_4 : f32 to vector<16x10xf32>
    %14 = arith.select %12, %5, %13 : vector<16x10xi1>, vector<16x10xf32>
    %cst_5 = arith.constant dense<0.000000e+00> : vector<16xf32>
    %15 = vector.multi_reduction <add>, %14, %cst_5 [1] : vector<16x10xf32> to vector<16xf32>
    %16 = vector.shape_cast %15 : vector<16xf32> to vector<16x1xf32>
    %17 = math.log %8 : vector<16x1xf32>
    %18 = arith.subf %17, %16 : vector<16x1xf32>
    %c-100_i32 = arith.constant -100 : i32
    %19 = vector.broadcast %c-100_i32 : i32 to vector<16x1xi32>
    %20 = arith.cmpi ne, %1, %19 : vector<16x1xi32>
    %cst_6 = arith.constant 0.000000e+00 : f32
    %21 = vector.broadcast %cst_6 : f32 to vector<16x1xf32>
    %22 = arith.select %20, %18, %21 : vector<16x1xi1>, vector<16x1xf32>
    %c0_7 = arith.constant 0 : index
    %c0_8 = arith.constant 0 : index
    %23 = vector.load %arg3[%c0_7, %c0_8] : memref<16x1xf32, #tpu.memory_space<vmem>>, vector<16x1xf32>
    tpu.vector_store %arg3[%c0_7, %c0_8], %22 {strides = array<i32>} : memref<16x1xf32, #tpu.memory_space<vmem>>, vector<16x1xf32>,
    return
  }
  func.func @transform_0(%arg0: i32) -> (i32, i32) {
    %c0_i32 = arith.constant 0 : i32
    %c0_i32_0 = arith.constant 0 : i32
    return %arg0, %c0_i32 : i32, i32
  }
  func.func @transform_1(%arg0: i32) -> (i32, i32) {
    %c0_i32 = arith.constant 0 : i32
    %c0_i32_0 = arith.constant 0 : i32
    return %arg0, %c0_i32 : i32, i32
  }
  func.func @transform_2(%arg0: i32) -> (i32, i32) {
    %c0_i32 = arith.constant 0 : i32
    %c0_i32_0 = arith.constant 0 : i32
    return %arg0, %c0_i32 : i32, i32
  }
}

</mosaic_0001>

<llo_original>
// kernel: tpu_custom_call.1
$region0: #{tpu_custom_call.1}
  #allocation0 [shape = 'u32[]', space=smem, size = 0x4, offset = 0x4, fixed_abs, tag = 'smem constant byte address 0x4 - core index']
  #allocation1 [shape = 'u32[144,128]{1,0:T(1,128)}', space=vmem, size = 0x12000, scoped, tag = 'internal scratch']
  %s0 = inlined_call_operand.vmem [shape: f32[16,10], index: 0, kind: input, shape index: {}]
  %s1 = inlined_call_operand.vmem [shape: s32[16,1], index: 1, kind: input, shape index: {}]
  %s2 = inlined_call_operand.vmem [shape: f32[16,1], index: 2, kind: output, shape index: {}]
  %s3 = sld [smem:[#allocation0]]
  $region18: #{tpu_custom_call.1} parent=0
    _
  %s5 = ssub.s32 1, %s3
  %s6 = scalar_select 0, %s5, %s3
  // Predicated region
  $region2: #{tpu_custom_call.1} parent=0 // pred_check
    _
  $region3: #{tpu_custom_call.1} parent=0 // pred_check_branch
    %8 = sbr.rel (0) target = $region5
  $region4: #{tpu_custom_call.1} parent=0 // pred_region
    _
  $region5: #{tpu_custom_call.1} parent=0 // pred_fallthru
    _
  // Predicated region
  $region6: #{tpu_custom_call.1} parent=0 // pred_check
    _
  $region7: #{tpu_custom_call.1} parent=0 // pred_check_branch
    %10 = sbr.rel (0) target = $region9
  $region8: #{tpu_custom_call.1} parent=0 // pred_region
    _
  $region9: #{tpu_custom_call.1} parent=0 // pred_fallthru
    _
  %v11 = vld [vmem:[%s0] sm:$0xff]
  %v12 = vld [vmem:[%s0 + $0x8] sm:$0xff]
  %v13 = vld [vmem:[%s1] sm:$0xff]
  %v14 = vld [vmem:[%s1 + $0x8] sm:$0xff]
  %vm15 = vcmask 80896
  %v16 = vsel %vm15, %v11, -inf
  %17 = vmax.xlane.f32.xlu0 %v16
  %v18 = vpop.xlane.xlu0 %17
  %v19 = vsel %vm15, %v12, -inf
  %20 = vmax.xlane.f32.xlu0 %v19
  %v21 = vpop.xlane.xlu0 %20
  %v22 = vsub.f32 %v11, %v18
  %v23 = vsub.f32 %v12, %v21
  %v24 = vmul.f32 %v22, 1.442695
  %v25 = vpow.pop %v24
  %v26 = vmul.f32 %v23, 1.442695
  %v27 = vpow.pop %v26
  %v28 = vsel %vm15, %v25, 0.0
  %29 = vadd.xlane.f32.xlu0 %v28
  %v30 = vpop.xlane.xlu0 %29
  %v31 = vsel %vm15, %v27, 0.0
  %32 = vadd.xlane.f32.xlu0 %v31
  %v33 = vpop.xlane.xlu0 %32
  %v34 = vlaneseq
  %v35 = vand.u32 %v34, 127
  %36 = vset.pattern.permute.xlu0 0
  %37 = vperm.xlu0 %36, %v13
  %v38 = vpop.permute.xlu0 %37
  %39 = vset.pattern.permute.xlu0 0
  %40 = vperm.xlu0 %39, %v14
  %v41 = vpop.permute.xlu0 %40
  %vm42 = vcmp.eq.s32.totalorder %v35, %v38
  %vm43 = vcmp.eq.s32.totalorder %v35, %v41
  %v44 = vsel %vm42, %v22, 0.0
  %v45 = vsel %vm43, %v23, 0.0
  %v46 = vsel %vm15, %v44, 0.0
  %47 = vadd.xlane.f32.xlu0 %v46
  %v48 = vpop.xlane.xlu0 %47
  %v49 = vsel %vm15, %v45, 0.0
  %50 = vadd.xlane.f32.xlu0 %v49
  %v51 = vpop.xlane.xlu0 %50
  %v52 = vlog2.pop %v30
  %v53 = vmul.f32 %v52, 0.6931472
  %v54 = vlog2.pop %v33
  %v55 = vmul.f32 %v54, 0.6931472
  %v56 = vsub.f32 %v53, %v48
  %v57 = vsub.f32 %v55, %v51
  %vm58 = vcmp.ne.s32.totalorder %v13, 4294967196
  %vm59 = vcmp.ne.s32.totalorder %v14, 4294967196
  %v60 = vsel %vm58, %v56, 0.0
  %v61 = vsel %vm59, %v57, 0.0
  %vm62 = vcmask 7168
  %63 = vst.msk [vmem:[%s2] sm:$0xff] %vm62, %v60
  %64 = vst.msk [vmem:[%s2 + $0x8] sm:$0xff] %vm62, %v61
  // Predicated region
  $region10: #{tpu_custom_call.1} parent=0 // pred_check
    _
  $region11: #{tpu_custom_call.1} parent=0 // pred_check_branch
    %66 = sbr.rel (0) target = $region13
  $region12: #{tpu_custom_call.1} parent=0 // pred_region
    _
  $region13: #{tpu_custom_call.1} parent=0 // pred_fallthru
    _
  // Predicated region
  $region14: #{tpu_custom_call.1} parent=0 // pred_check
    _
  $region15: #{tpu_custom_call.1} parent=0 // pred_check_branch
    %68 = sbr.rel (0) target = $region17
  $region16: #{tpu_custom_call.1} parent=0 // pred_region
    _
  $region17: #{tpu_custom_call.1} parent=0 // pred_fallthru
    _

</llo_original>
